<compile_context>
chip_gen: v7x
topology: tpu7x:2x2x1
jax: 0.10.0
libtpu: 0.0.40
codegen_flags: <defaults>
</compile_context>

<pallas_src>
import math
from functools import partial

import jax
import jax.numpy as jnp
from jax.experimental import pallas as pl
from jax.experimental.pallas import tpu as pltpu


def _round_up(n: int, m: int) -> int:
    return ((n + m - 1) // m) * m


def _adv_head_kernel(x_ref, w1_ref, b1_ref, w2_ref, b2_ref, w3_ref, b3_ref,
                     out_ref, *, op_dtype):
    """One batch tile: (TB, C) -> 256 -> 64 -> 1, LeakyReLU(0.1) between layers."""
    # In-kernel cast: one f32 HBM read of x, bf16 (or f32) operands on the MXU.
    x = x_ref[...].astype(op_dtype)

    h1 = jnp.dot(x, w1_ref[...], preferred_element_type=jnp.float32) + b1_ref[...]
    h1 = jnp.maximum(h1, 0.1 * h1)                  # LeakyReLU(0.1), kept in f32

    h2 = jnp.dot(h1.astype(op_dtype), w2_ref[...],
                 preferred_element_type=jnp.float32) + b2_ref[...]
    h2 = jnp.maximum(h2, 0.1 * h2)

    # Final 64 -> 1 layer: an N=1 MXU matmul lights up <1% of the output lanes,
    # so do it as a VPU multiply + XLU lane reduce.  w3_ref is a (1, 64) row.
    o = jnp.sum(h2 * w3_ref[...], axis=-1, keepdims=True) + b3_ref[...]
    out_ref[...] = o.astype(out_ref.dtype)


def _choose_tiling(B: int, block_b: int):
    """Pick batch tile TB (multiple of 8), tile count n, padded batch Bp = n*TB."""
    B8 = _round_up(max(B, 1), 8)
    tb_cap = _round_up(min(block_b, B8), 8)
    n = math.ceil(B8 / tb_cap)
    if n == 1 and B8 >= 16:
        n = 2                                # v7x: give both TensorCores a tile
    TB = _round_up(math.ceil(B8 / n), 8)     # ~B/n: avoids padding to ~2x batch
    n = math.ceil(B8 / TB)
    return TB, n, n * TB


def _vmem_limit_bytes(TB, C, H1, H2, x_itemsize, op_itemsize):
    """Scoped-VMEM limit from the actual (lane/sublane padded) buffer budget."""
    lane = lambda k: _round_up(k, 128)
    sub = lambda k: _round_up(max(k, 1), 8)
    budget = 2 * TB * lane(C) * x_itemsize            # x tile, double-buffered stream
    budget += 2 * TB * lane(1) * 4                    # out tile, double-buffered stream
    budget += 2 * sub(C) * lane(H1) * op_itemsize     # w1 (VMEM-resident)
    budget += 2 * sub(H1) * lane(H2) * op_itemsize    # w2 (VMEM-resident)
    budget += 2 * 4 * sub(1) * lane(H1) * 4           # b1, b2, w3 row, b3 (over-estimate)
    budget += TB * (lane(C) * op_itemsize             # x cast temp
                    + lane(H1) * (4 + op_itemsize)    # h1 (f32) + its cast
                    + lane(H2) * 4 + lane(1) * 4)     # h2, o
    # Generous headroom; clamp to [32 MiB, 64 MiB] so it is safe on v5e/v6e/v7x.
    return int(min(max(budget * 5 // 4, 32 << 20), 64 << 20))


def adversarial_head(x_nchw, params, *, block_b: int = 2048,
                     operand_dtype=jnp.float32):
    """x_nchw: (B, hidden, 1, 1).  Returns (out, out_detached), each (B, 1) f32.

    operand_dtype=jnp.bfloat16 runs the two MXU matmuls with bf16 operands and
    f32 accumulation (x is cast inside the kernel; it stays f32 in HBM).
    Default f32 matches the PyTorch module.
    """
    B, C, H, W = x_nchw.shape
    assert H == 1 and W == 1, "AdversarialHead.forward implies a 1x1 spatial map"
    w1, b1, w2, b2, w3, b3 = params
    h1_dim = w1.shape[1]            # 256
    h2_dim = w2.shape[1]            # 64

    x2d = x_nchw.reshape(B, C)      # NOT cast here: keep a single HBM pass over x
    w1 = w1.astype(operand_dtype)
    w2 = w2.astype(operand_dtype)
    b1 = b1.reshape(1, h1_dim).astype(jnp.float32)
    b2 = b2.reshape(1, h2_dim).astype(jnp.float32)
    w3_row = w3.reshape(1, h2_dim).astype(jnp.float32)   # (64, 1) -> (1, 64) row
    b3 = b3.reshape(1, 1).astype(jnp.float32)

    TB, n_tiles, Bp = _choose_tiling(B, block_b)
    if Bp != B:
        # Zero-padded tail rows flow through the MLP (producing bias-derived
        # values) and are sliced off below; nothing reduces over batch in-kernel.
        x2d = jnp.pad(x2d, ((0, Bp - B), (0, 0)))

    cost = pl.CostEstimate(
        flops=2 * Bp * (C * h1_dim + h1_dim * h2_dim + h2_dim),
        transcendentals=0,
        bytes_accessed=(x2d.size * x2d.dtype.itemsize
                        + w1.size * w1.dtype.itemsize
                        + w2.size * w2.dtype.itemsize
                        + (b1.size + b2.size + w3_row.size + b3.size) * 4
                        + Bp * 4),
    )

    out = pl.pallas_call(
        partial(_adv_head_kernel, op_dtype=operand_dtype),
        out_shape=jax.ShapeDtypeStruct((Bp, 1), jnp.float32),
        grid=(n_tiles,),
        in_specs=[
            pl.BlockSpec((TB, C), lambda i: (i, 0)),           # x tile (streamed)
            pl.BlockSpec((C, h1_dim), lambda i: (0, 0)),       # w1 (VMEM-resident)
            pl.BlockSpec((1, h1_dim), lambda i: (0, 0)),       # b1
            pl.BlockSpec((h1_dim, h2_dim), lambda i: (0, 0)),  # w2
            pl.BlockSpec((1, h2_dim), lambda i: (0, 0)),       # b2
            pl.BlockSpec((1, h2_dim), lambda i: (0, 0)),       # w3 as a row
            pl.BlockSpec((1, 1), lambda i: (0, 0)),            # b3
        ],
        out_specs=pl.BlockSpec((TB, 1), lambda i: (i, 0)),
        compiler_params=pltpu.CompilerParams(
            dimension_semantics=("parallel",),       # v7x: batch tiles over 2 TCs
            vmem_limit_bytes=_vmem_limit_bytes(
                TB, C, h1_dim, h2_dim,
                x2d.dtype.itemsize, jnp.dtype(operand_dtype).itemsize)),
        cost_estimate=cost,
    )(x2d, w1, b1, w2, b2, w3_row, b3)

    out = out[:B]
    # forward(x) and forward(x.detach()) are numerically identical; detach only
    # affects autograd, so the wrapper returns the same values twice.
    return out, out


def init_params(key, hidden_size):
    """Deterministic synthetic weights, built directly in (Cin, Cout) matmul
    layout with bias as (1, Cout).  NOTE: real PyTorch conv1x1 weights are
    (Cout, Cin, 1, 1) and must be reshaped to (Cout, Cin) then transposed
    before being passed here."""
    ks = jax.random.split(key, 6)
    dims = [(hidden_size, 256), (256, 64), (64, 1)]
    params = []
    for i, (cin, cout) in enumerate(dims):
        scale = 1.0 / jnp.sqrt(jnp.float32(cin))
        w = jax.random.uniform(ks[2 * i], (cin, cout), jnp.float32, -scale, scale)
        b = jax.random.uniform(ks[2 * i + 1], (1, cout), jnp.float32, -scale, scale)
        params += [w, b]
    return tuple(params)


if __name__ == "__main__":
    hidden_size = 32
    key = jax.random.PRNGKey(0)
    k_x, k_p = jax.random.split(key)
    params = init_params(k_p, hidden_size)

    def reference(x_nchw):
        w1, b1, w2, b2, w3, b3 = params
        xr = x_nchw.reshape(x_nchw.shape[0], hidden_size)
        h1 = xr @ w1 + b1
        h1 = jnp.where(h1 > 0, h1, 0.1 * h1)
        h2 = h1 @ w2 + b2
        h2 = jnp.where(h2 > 0, h2, 0.1 * h2)
        return h2 @ w3 + b3

    # batch=8: single tile; batch=5: padded tail rows inside one tile;
    # batch=1029: multi-tile grid (two TB=520 tiles) plus tail padding.
    for batch in (8, 5, 1029):
        x = jax.random.normal(jax.random.fold_in(k_x, batch),
                              (batch, hidden_size, 1, 1), dtype=jnp.float32)
        out, out_det = adversarial_head(x, params)
        jax.block_until_ready((out, out_det))
        ref = reference(x)
        assert out.shape == (batch, 1) and out_det.shape == (batch, 1)
        assert jnp.allclose(out, ref, atol=1e-5), f"mismatch vs reference (B={batch})"
        assert jnp.allclose(out_det, ref, atol=1e-5), f"detached path mismatch (B={batch})"

    # bf16-operand path (f32 accumulation): separate, looser-tolerance check.
    xb = jax.random.normal(jax.random.fold_in(k_x, 999),
                           (64, hidden_size, 1, 1), dtype=jnp.float32)
    out_bf, _ = adversarial_head(xb, params, operand_dtype=jnp.bfloat16)
    jax.block_until_ready(out_bf)
    assert out_bf.shape == (64, 1)
    assert jnp.allclose(out_bf, reference(xb), atol=5e-2, rtol=5e-2), "bf16 path mismatch"

    print("KERNEL_OK")
</pallas_src>

<mosaic_0001>
module attributes {stable_mosaic.version = 11 : i64} {
  func.func @_adv_head_kernel(%arg0: i32, %arg1: memref<8x32xf32, #tpu.memory_space<vmem>>, %arg2: memref<32x256xf32, #tpu.memory_space<vmem>>, %arg3: memref<1x256xf32, #tpu.memory_space<vmem>>, %arg4: memref<256x64xf32, #tpu.memory_space<vmem>>, %arg5: memref<1x64xf32, #tpu.memory_space<vmem>>, %arg6: memref<1x64xf32, #tpu.memory_space<vmem>>, %arg7: memref<1x1xf32, #tpu.memory_space<vmem>>, %arg8: memref<8x1xf32, #tpu.memory_space<vmem>>) attributes {dimension_semantics = [#tpu.dimension_semantics<parallel>], iteration_bounds = array<i64: 1>, scalar_prefetch = 0 : i64, scratch_operands = 0 : i64, tpu.core_type = #tpu.core_type<tc>, window_params = [{transform_indices = @transform_0, window_bounds = array<i64: 8, 32>}, {pipeline_mode = #tpu.pipeline_mode<synchronous>, transform_indices = @transform_1, window_bounds = array<i64: 32, 256>}, {pipeline_mode = #tpu.pipeline_mode<synchronous>, transform_indices = @transform_2, window_bounds = array<i64: 1, 256>}, {pipeline_mode = #tpu.pipeline_mode<synchronous>, transform_indices = @transform_3, window_bounds = array<i64: 256, 64>}, {pipeline_mode = #tpu.pipeline_mode<synchronous>, transform_indices = @transform_4, window_bounds = array<i64: 1, 64>}, {pipeline_mode = #tpu.pipeline_mode<synchronous>, transform_indices = @transform_5, window_bounds = array<i64: 1, 64>}, {pipeline_mode = #tpu.pipeline_mode<synchronous>, transform_indices = @transform_6, window_bounds = array<i64: 1, 1>}, {transform_indices = @transform_7, window_bounds = array<i64: 8, 1>}]} {
    %c0 = arith.constant 0 : index
    %c0_0 = arith.constant 0 : index
    %0 = vector.load %arg1[%c0, %c0_0] : memref<8x32xf32, #tpu.memory_space<vmem>>, vector<8x32xf32>
    %c0_1 = arith.constant 0 : index
    %c0_2 = arith.constant 0 : index
    %1 = vector.load %arg2[%c0_1, %c0_2] : memref<32x256xf32, #tpu.memory_space<vmem>>, vector<32x256xf32>
    %cst = arith.constant dense<0.000000e+00> : vector<8x256xf32>
    %2 = tpu.matmul %0, %1, %cst {dimension_numbers = #tpu.dot_dimension_numbers<[1], [0], [0], [1], [0, 0, 1, 1], [], []>} : vector<8x32xf32>, vector<32x256xf32>, vector<8x256xf32> -> vector<8x256xf32>
    %c0_3 = arith.constant 0 : index
    %c0_4 = arith.constant 0 : index
    %3 = vector.load %arg3[%c0_3, %c0_4] : memref<1x256xf32, #tpu.memory_space<vmem>>, vector<1x256xf32>
    %4 = vector.broadcast %3 : vector<1x256xf32> to vector<8x256xf32>
    %5 = arith.addf %2, %4 : vector<8x256xf32>
    %cst_5 = arith.constant 1.000000e-01 : f32
    %6 = vector.broadcast %cst_5 : f32 to vector<8x256xf32>
    %7 = arith.mulf %6, %5 : vector<8x256xf32>
    %8 = arith.maximumf %5, %7 : vector<8x256xf32>
    %c0_6 = arith.constant 0 : index
    %c0_7 = arith.constant 0 : index
    %9 = vector.load %arg4[%c0_6, %c0_7] : memref<256x64xf32, #tpu.memory_space<vmem>>, vector<256x64xf32>
    %cst_8 = arith.constant dense<0.000000e+00> : vector<8x64xf32>
    %10 = tpu.matmul %8, %9, %cst_8 {dimension_numbers = #tpu.dot_dimension_numbers<[1], [0], [0], [1], [0, 0, 1, 1], [], []>} : vector<8x256xf32>, vector<256x64xf32>, vector<8x64xf32> -> vector<8x64xf32>
    %c0_9 = arith.constant 0 : index
    %c0_10 = arith.constant 0 : index
    %11 = vector.load %arg5[%c0_9, %c0_10] : memref<1x64xf32, #tpu.memory_space<vmem>>, vector<1x64xf32>
    %12 = vector.broadcast %11 : vector<1x64xf32> to vector<8x64xf32>
    %13 = arith.addf %10, %12 : vector<8x64xf32>
    %cst_11 = arith.constant 1.000000e-01 : f32
    %14 = vector.broadcast %cst_11 : f32 to vector<8x64xf32>
    %15 = arith.mulf %14, %13 : vector<8x64xf32>
    %16 = arith.maximumf %13, %15 : vector<8x64xf32>
    %c0_12 = arith.constant 0 : index
    %c0_13 = arith.constant 0 : index
    %17 = vector.load %arg6[%c0_12, %c0_13] : memref<1x64xf32, #tpu.memory_space<vmem>>, vector<1x64xf32>
    %18 = vector.broadcast %17 : vector<1x64xf32> to vector<8x64xf32>
    %19 = arith.mulf %16, %18 : vector<8x64xf32>
    %cst_14 = arith.constant dense<0.000000e+00> : vector<8xf32>
    %20 = vector.multi_reduction <add>, %19, %cst_14 [1] : vector<8x64xf32> to vector<8xf32>
    %21 = vector.shape_cast %20 : vector<8xf32> to vector<8x1xf32>
    %c0_15 = arith.constant 0 : index
    %c0_16 = arith.constant 0 : index
    %22 = vector.load %arg7[%c0_15, %c0_16] : memref<1x1xf32, #tpu.memory_space<vmem>>, vector<1x1xf32>
    %23 = vector.broadcast %22 : vector<1x1xf32> to vector<8x1xf32>
    %24 = arith.addf %21, %23 : vector<8x1xf32>
    %c0_17 = arith.constant 0 : index
    %c0_18 = arith.constant 0 : index
    %25 = vector.load %arg8[%c0_17, %c0_18] : memref<8x1xf32, #tpu.memory_space<vmem>>, vector<8x1xf32>
    tpu.vector_store %arg8[%c0_17, %c0_18], %24 {strides = array<i32>} : memref<8x1xf32, #tpu.memory_space<vmem>>, vector<8x1xf32>,
    return
  }
  func.func @transform_0(%arg0: i32) -> (i32, i32) {
    %c0_i32 = arith.constant 0 : i32
    %c0_i32_0 = arith.constant 0 : i32
    return %arg0, %c0_i32 : i32, i32
  }
  func.func @transform_1(%arg0: i32) -> (i32, i32) {
    %c0_i32 = arith.constant 0 : i32
    %c0_i32_0 = arith.constant 0 : i32
    %c0_i32_1 = arith.constant 0 : i32
    return %c0_i32, %c0_i32_0 : i32, i32
  }
  func.func @transform_2(%arg0: i32) -> (i32, i32) {
    %c0_i32 = arith.constant 0 : i32
    %c0_i32_0 = arith.constant 0 : i32
    %c0_i32_1 = arith.constant 0 : i32
    return %c0_i32, %c0_i32_0 : i32, i32
  }
  func.func @transform_3(%arg0: i32) -> (i32, i32) {
    %c0_i32 = arith.constant 0 : i32
    %c0_i32_0 = arith.constant 0 : i32
    %c0_i32_1 = arith.constant 0 : i32
    return %c0_i32, %c0_i32_0 : i32, i32
  }
  func.func @transform_4(%arg0: i32) -> (i32, i32) {
    %c0_i32 = arith.constant 0 : i32
    %c0_i32_0 = arith.constant 0 : i32
    %c0_i32_1 = arith.constant 0 : i32
    return %c0_i32, %c0_i32_0 : i32, i32
  }
  func.func @transform_5(%arg0: i32) -> (i32, i32) {
    %c0_i32 = arith.constant 0 : i32
    %c0_i32_0 = arith.constant 0 : i32
    %c0_i32_1 = arith.constant 0 : i32
    return %c0_i32, %c0_i32_0 : i32, i32
  }
  func.func @transform_6(%arg0: i32) -> (i32, i32) {
    %c0_i32 = arith.constant 0 : i32
    %c0_i32_0 = arith.constant 0 : i32
    %c0_i32_1 = arith.constant 0 : i32
    return %c0_i32, %c0_i32_0 : i32, i32
  }
  func.func @transform_7(%arg0: i32) -> (i32, i32) {
    %c0_i32 = arith.constant 0 : i32
    %c0_i32_0 = arith.constant 0 : i32
    return %arg0, %c0_i32 : i32, i32
  }
}

</mosaic_0001>

<llo_original>
// kernel: tpu_custom_call.1
$region0: #{tpu_custom_call.1}
  #allocation0 [shape = 'u32[]', space=smem, size = 0x4, offset = 0x4, fixed_abs, tag = 'smem constant byte address 0x4 - core index']
  #allocation1 [shape = 'u32[144,128]{1,0:T(1,128)}', space=vmem, size = 0x12000, scoped, tag = 'internal scratch']
  #allocation2 [shape = 'f32[1,1]{1,0:T(1,128)S(1)}', space=vmem, size = 0x200, scoped, tag = 'scoped memory for tpu_custom_call.1']
  %s0 = inlined_call_operand.vmem [shape: f32[8,32], index: 0, kind: input, shape index: {}]
  %s1 = inlined_call_operand.vmem [shape: f32[32,256], index: 1, kind: input, shape index: {}]
  %s2 = inlined_call_operand.vmem [shape: f32[1,256], index: 2, kind: input, shape index: {}]
  %s3 = inlined_call_operand.vmem [shape: f32[256,64], index: 3, kind: input, shape index: {}]
  %s4 = inlined_call_operand.vmem [shape: f32[1,64], index: 4, kind: input, shape index: {}]
  %s5 = inlined_call_operand.vmem [shape: f32[1,64], index: 5, kind: input, shape index: {}]
  %s6 = inlined_call_operand.<no memory space> [shape: f32[1,1], index: 6, kind: input, shape index: {}]
  %s7 = inlined_call_operand.vmem [shape: f32[8,1], index: 7, kind: output, shape index: {}]
  %s8 = sld [smem:[#allocation0]]
  $region38: #{tpu_custom_call.1} parent=0
    _
  %s10 = ssub.s32 1, %s8
  %s11 = scalar_select 0, %s10, %s8
  %v12 = vstv %s6
  %13 = vst [vmem:[#allocation2] sm:$0x1] %v12
  // Predicated region
  $region2: #{tpu_custom_call.1} parent=0 // pred_check
    _
  $region3: #{tpu_custom_call.1} parent=0 // pred_check_branch
    %15 = sbr.rel (0) target = $region5
  $region4: #{tpu_custom_call.1} parent=0 // pred_region
    _
  $region5: #{tpu_custom_call.1} parent=0 // pred_fallthru
    _
  // Predicated region
  $region6: #{tpu_custom_call.1} parent=0 // pred_check
    _
  $region7: #{tpu_custom_call.1} parent=0 // pred_check_branch
    %17 = sbr.rel (0) target = $region9
  $region8: #{tpu_custom_call.1} parent=0 // pred_region
    _
  $region9: #{tpu_custom_call.1} parent=0 // pred_fallthru
    _
  // Predicated region
  $region10: #{tpu_custom_call.1} parent=0 // pred_check
    _
  $region11: #{tpu_custom_call.1} parent=0 // pred_check_branch
    %19 = sbr.rel (0) target = $region13
  $region12: #{tpu_custom_call.1} parent=0 // pred_region
    _
  $region13: #{tpu_custom_call.1} parent=0 // pred_fallthru
    _
  // Predicated region
  $region14: #{tpu_custom_call.1} parent=0 // pred_check
    _
  $region15: #{tpu_custom_call.1} parent=0 // pred_check_branch
    %21 = sbr.rel (0) target = $region17
  $region16: #{tpu_custom_call.1} parent=0 // pred_region
    _
  $region17: #{tpu_custom_call.1} parent=0 // pred_fallthru
    _
  // Predicated region
  $region18: #{tpu_custom_call.1} parent=0 // pred_check
    _
  $region19: #{tpu_custom_call.1} parent=0 // pred_check_branch
    %23 = sbr.rel (0) target = $region21
  $region20: #{tpu_custom_call.1} parent=0 // pred_region
    _
  $region21: #{tpu_custom_call.1} parent=0 // pred_fallthru
    _
  // Predicated region
  $region22: #{tpu_custom_call.1} parent=0 // pred_check
    _
  $region23: #{tpu_custom_call.1} parent=0 // pred_check_branch
    %25 = sbr.rel (0) target = $region25
  $region24: #{tpu_custom_call.1} parent=0 // pred_region
    _
  $region25: #{tpu_custom_call.1} parent=0 // pred_fallthru
    _
  // Predicated region
  $region26: #{tpu_custom_call.1} parent=0 // pred_check
    _
  $region27: #{tpu_custom_call.1} parent=0 // pred_check_branch
    %27 = sbr.rel (0) target = $region29
  $region28: #{tpu_custom_call.1} parent=0 // pred_region
    _
  $region29: #{tpu_custom_call.1} parent=0 // pred_fallthru
    _
  %v28 = vld [vmem:[%s0] sm:$0xff]
  %v29 = vld [vmem:[%s1] sm:$0xff]
  %v30 = vld [vmem:[%s1 + $0x8] sm:$0xff]
  %v31 = vld [vmem:[%s1 + $0x10] sm:$0xff]
  %v32 = vld [vmem:[%s1 + $0x18] sm:$0xff]
  %v33 = vld [vmem:[%s1 + $0x20] sm:$0xff]
  %v34 = vld [vmem:[%s1 + $0x28] sm:$0xff]
  %v35 = vld [vmem:[%s1 + $0x30] sm:$0xff]
  %v36 = vld [vmem:[%s1 + $0x38] sm:$0xff]
  %v37 = vld [vmem:[%s2] sm:$0x3]
  %v39 = vlaneseq
  %v40 = vshrl.u32 %v39, 7
  %v41 = vsub.s32 0, %v40
  %v42 = vrot.slane %v37, %v41
  %v43 = vlaneseq
  %v44 = vshrl.u32 %v43, 7
  %v45 = vsub.s32 1, %v44
  %v46 = vrot.slane %v37, %v45
  %vm49 = vcmask 261120
  %v51 = vsel %vm49, %v28, 0
  %53 = vmatprep.subr.mxu0 %v30
  %54 = vmatpush1.msra.mxu0 %v29
  %55 = vmatprep.subr.mxu0 %v32
  %56 = vmatpush1.msra.mxu0 %v31
  %57 = vmatprep.subr.mxu0 %v34
  %58 = vmatpush1.msra.mxu0 %v33
  %59 = vmatprep.subr.mxu0 %v36
  %60 = vmatpush1.msra.mxu0 %v35
  %61 = vmatprep.subr.mxu0 0.0
  %62 = vmatpush1.msra.mxu0 0.0
  %63 = vmatprep.subr.mxu0 0.0
  %64 = vmatpush1.msra.mxu0 0.0
  %65 = vmatprep.subr.mxu0 0.0
  %66 = vmatpush1.msra.mxu0 0.0
  %67 = vmatprep.subr.mxu0 0.0
  %68 = vmatpush1.msra.mxu0 0.0
  %69 = vmatprep.subr.mxu0 0.0
  %70 = vmatpush1.msra.mxu0 0.0
  %71 = vmatprep.subr.mxu0 0.0
  %72 = vmatpush1.msra.mxu0 0.0
  %73 = vmatprep.subr.mxu0 0.0
  %74 = vmatpush1.msra.mxu0 0.0
  %75 = vmatprep.subr.mxu0 0.0
  %76 = vmatpush1.msra.mxu0 0.0
  %77 = vmatprep.subr.mxu0 0.0
  %78 = vmatpush1.msra.mxu0 0.0
  %79 = vmatprep.subr.mxu0 0.0
  %80 = vmatpush1.msra.mxu0 0.0
  %81 = vmatprep.subr.mxu0 0.0
  %82 = vmatpush1.msra.mxu0 0.0
  %83 = vmatprep.subr.mxu0 0.0
  %84 = vmatpush1.msra.mxu0 0.0
  %85 = vmatprep.subr.mxu0 0.0
  %86 = vmatpush1.msra.mxu0 0.0
  %87 = vmatprep.subr.mxu0 0.0
  %88 = vmatpush1.msra.mxu0 0.0
  %89 = vmatprep.subr.mxu0 0.0
  %90 = vmatpush1.msra.mxu0 0.0
  %91 = vmatprep.subr.mxu0 0.0
  %92 = vmatpush1.msra.mxu0 0.0
  %93 = vmatprep.subr.mxu0 0.0
  %94 = vmatpush1.msra.mxu0 0.0
  %95 = vmatprep.subr.mxu0 0.0
  %96 = vmatpush1.msra.mxu0 0.0
  %97 = vmatprep.subr.mxu0 0.0
  %98 = vmatpush1.msra.mxu0 0.0
  %99 = vmatprep.subr.mxu0 0.0
  %100 = vmatpush1.msra.mxu0 0.0
  %101 = vmatprep.subr.mxu0 0.0
  %102 = vmatpush1.msra.mxu0 0.0
  %103 = vmatprep.subr.mxu0 0.0
  %104 = vmatpush1.msra.mxu0 0.0
  %105 = vmatprep.subr.mxu0 0.0
  %106 = vmatpush1.msra.mxu0 0.0
  %107 = vmatprep.subr.mxu0 0.0
  %108 = vmatpush1.msra.mxu0 0.0
  %109 = vmatprep.subr.mxu0 0.0
  %110 = vmatpush1.msra.mxu0 0.0
  %111 = vmatprep.subr.mxu0 0.0
  %112 = vmatpush1.msra.mxu0 0.0
  %113 = vmatprep.subr.mxu0 0.0
  %114 = vmatpush1.msra.mxu0 0.0
  %115 = vmatprep.subr.mxu0 0.0
  %116 = vmatpush1.msra.mxu0 0.0
  %117 = vmatprep.mubr.f32.mxu0 0.0
  %118 = vmatmul.mubr.f32.gmra.mrb[0].mxu0 %v51
  %v119 = vpop.f32.mrb[0].mxu0
  %v120 = vadd.f32 %v42, %v119
  %v121 = vpop.f32.mrb[0].mxu0
  %v122 = vadd.f32 %v46, %v121
  %123 = vdwg.mxu0
  %v124 = vmul.f32 %v120, 0.1
  %v125 = vmul.f32 %v122, 0.1
  %v126 = vmax.f32 %v120, %v124
  %v127 = vmax.f32 %v122, %v125
  %v128 = vld [vmem:[%s3] sm:$0xff]
  %v129 = vld [vmem:[%s3 + $0x8] sm:$0xff]
  %v130 = vld [vmem:[%s3 + $0x10] sm:$0xff]
  %v131 = vld [vmem:[%s3 + $0x18] sm:$0xff]
  %v132 = vld [vmem:[%s3 + $0x20] sm:$0xff]
  %v133 = vld [vmem:[%s3 + $0x28] sm:$0xff]
  %v134 = vld [vmem:[%s3 + $0x30] sm:$0xff]
  %v135 = vld [vmem:[%s3 + $0x38] sm:$0xff]
  %v136 = vld [vmem:[%s3 + $0x40] sm:$0xff]
  %v137 = vld [vmem:[%s3 + $0x48] sm:$0xff]
  %v138 = vld [vmem:[%s3 + $0x50] sm:$0xff]
  %v139 = vld [vmem:[%s3 + $0x58] sm:$0xff]
  %v140 = vld [vmem:[%s3 + $0x60] sm:$0xff]
  %v141 = vld [vmem:[%s3 + $0x68] sm:$0xff]
  %v142 = vld [vmem:[%s3 + $0x70] sm:$0xff]
  %v143 = vld [vmem:[%s3 + $0x78] sm:$0xff]
  %v144 = vld [vmem:[%s3 + $0x80] sm:$0xff]
  %v145 = vld [vmem:[%s3 + $0x88] sm:$0xff]
  %v146 = vld [vmem:[%s3 + $0x90] sm:$0xff]
  %v147 = vld [vmem:[%s3 + $0x98] sm:$0xff]
  %v148 = vld [vmem:[%s3 + $0xa0] sm:$0xff]
  %v149 = vld [vmem:[%s3 + $0xa8] sm:$0xff]
  %v150 = vld [vmem:[%s3 + $0xb0] sm:$0xff]
  %v151 = vld [vmem:[%s3 + $0xb8] sm:$0xff]
  %v152 = vld [vmem:[%s3 + $0xc0] sm:$0xff]
  %v153 = vld [vmem:[%s3 + $0xc8] sm:$0xff]
  %v154 = vld [vmem:[%s3 + $0xd0] sm:$0xff]
  %v155 = vld [vmem:[%s3 + $0xd8] sm:$0xff]
  %v156 = vld [vmem:[%s3 + $0xe0] sm:$0xff]
  %v157 = vld [vmem:[%s3 + $0xe8] sm:$0xff]
  %v158 = vld [vmem:[%s3 + $0xf0] sm:$0xff]
  %v159 = vld [vmem:[%s3 + $0xf8] sm:$0xff]
  %v160 = vld [vmem:[%s4] sm:$0x1]
  %v162 = vlaneseq
  %v163 = vshrl.u32 %v162, 7
  %v164 = vsub.s32 0, %v163
  %v165 = vrot.slane %v160, %v164
  %167 = vmatprep.subr.mxu0 0.0
  %168 = vmatpush1.msra.mxu0 %v128
  %169 = vmatprep.subr.mxu0 0.0
  %170 = vmatpush1.msra.mxu0 %v129
  %171 = vmatprep.subr.mxu0 0.0
  %172 = vmatpush1.msra.mxu0 %v130
  %173 = vmatprep.subr.mxu0 0.0
  %174 = vmatpush1.msra.mxu0 %v131
  %175 = vmatprep.subr.mxu0 0.0
  %176 = vmatpush1.msra.mxu0 %v132
  %177 = vmatprep.subr.mxu0 0.0
  %178 = vmatpush1.msra.mxu0 %v133
  %179 = vmatprep.subr.mxu0 0.0
  %180 = vmatpush1.msra.mxu0 %v134
  %181 = vmatprep.subr.mxu0 0.0
  %182 = vmatpush1.msra.mxu0 %v135
  %183 = vmatprep.subr.mxu0 0.0
  %184 = vmatpush1.msra.mxu0 %v136
  %185 = vmatprep.subr.mxu0 0.0
  %186 = vmatpush1.msra.mxu0 %v137
  %187 = vmatprep.subr.mxu0 0.0
  %188 = vmatpush1.msra.mxu0 %v138
  %189 = vmatprep.subr.mxu0 0.0
  %190 = vmatpush1.msra.mxu0 %v139
  %191 = vmatprep.subr.mxu0 0.0
  %192 = vmatpush1.msra.mxu0 %v140
  %193 = vmatprep.subr.mxu0 0.0
  %194 = vmatpush1.msra.mxu0 %v141
  %195 = vmatprep.subr.mxu0 0.0
  %196 = vmatpush1.msra.mxu0 %v142
  %197 = vmatprep.subr.mxu0 0.0
  %198 = vmatpush1.msra.mxu0 %v143
  %199 = vmatprep.subr.mxu0 0.0
  %200 = vmatpush1.msra.mxu0 %v144
  %201 = vmatprep.subr.mxu0 0.0
  %202 = vmatpush1.msra.mxu0 %v145
  %203 = vmatprep.subr.mxu0 0.0
  %204 = vmatpush1.msra.mxu0 %v146
  %205 = vmatprep.subr.mxu0 0.0
  %206 = vmatpush1.msra.mxu0 %v147
  %207 = vmatprep.subr.mxu0 0.0
  %208 = vmatpush1.msra.mxu0 %v148
  %209 = vmatprep.subr.mxu0 0.0
  %210 = vmatpush1.msra.mxu0 %v149
  %211 = vmatprep.subr.mxu0 0.0
  %212 = vmatpush1.msra.mxu0 %v150
  %213 = vmatprep.subr.mxu0 0.0
  %214 = vmatpush1.msra.mxu0 %v151
  %215 = vmatprep.subr.mxu0 0.0
  %216 = vmatpush1.msra.mxu0 %v152
  %217 = vmatprep.subr.mxu0 0.0
  %218 = vmatpush1.msra.mxu0 %v153
  %219 = vmatprep.subr.mxu0 0.0
  %220 = vmatpush1.msra.mxu0 %v154
  %221 = vmatprep.subr.mxu0 0.0
  %222 = vmatpush1.msra.mxu0 %v155
  %223 = vmatprep.subr.mxu0 0.0
  %224 = vmatpush1.msra.mxu0 %v156
  %225 = vmatprep.subr.mxu0 0.0
  %226 = vmatpush1.msra.mxu0 %v157
  %227 = vmatprep.subr.mxu0 0.0
  %228 = vmatpush1.msra.mxu0 %v158
  %229 = vmatprep.subr.mxu0 0.0
  %230 = vmatpush1.msra.mxu0 %v159
  %231 = vmatprep.mubr.f32.mxu0 %v127
  %232 = vmatmul.mubr.f32.gmra.mrb[0].mxu0 %v126
  %v233 = vpop.f32.mrb[0].mxu0
  %v234 = vadd.f32 %v165, %v233
  %v235 = vpop.f32.mrb[0].mxu0
  %236 = vdwg.mxu0
  %v237 = vmul.f32 %v234, 0.1
  %v238 = vmax.f32 %v234, %v237
  %v239 = vld [vmem:[%s5] sm:$0x1]
  %v241 = vlaneseq
  %v242 = vshrl.u32 %v241, 7
  %v243 = vsub.s32 0, %v242
  %v244 = vrot.slane %v239, %v243
  %v246 = vmul.f32 %v238, %v244
  %vm247 = vcmask 523264
  %v248 = vsel %vm247, %v246, 0.0
  %249 = vadd.xlane.f32.xlu0 %v248
  %v250 = vpop.xlane.xlu0 %249
  %v251 = vld [vmem:[#allocation2] sm:$0x1]
  %v253 = vlaneseq
  %v254 = vshrl.u32 %v253, 7
  %v255 = vsub.s32 0, %v254
  %v256 = vrot.slane %v251, %v255
  %v258 = vadd.f32 %v250, %v256
  %vm259 = vcmask 7168
  %260 = vst.msk [vmem:[%s7] sm:$0xff] %vm259, %v258
  // Predicated region
  $region30: #{tpu_custom_call.1} parent=0 // pred_check
    _
  $region31: #{tpu_custom_call.1} parent=0 // pred_check_branch
    %262 = sbr.rel (0) target = $region33
  $region32: #{tpu_custom_call.1} parent=0 // pred_region
    _
  $region33: #{tpu_custom_call.1} parent=0 // pred_fallthru
    _
  // Predicated region
  $region34: #{tpu_custom_call.1} parent=0 // pred_check
    _
  $region35: #{tpu_custom_call.1} parent=0 // pred_check_branch
    %264 = sbr.rel (0) target = $region37
  $region36: #{tpu_custom_call.1} parent=0 // pred_region
    _
  $region37: #{tpu_custom_call.1} parent=0 // pred_fallthru
    _

</llo_original>
